<compile_context>
chip_gen: v7x
topology: tpu7x:2x2x1
jax: 0.10.0
libtpu: 0.0.40
codegen_flags: <defaults>
</compile_context>

<pallas_src>
import math
import functools

import jax
import jax.numpy as jnp
from jax.experimental import pallas as pl
from jax.experimental.pallas import tpu as pltpu


def _full_spec(shape):
    nd = len(shape)
    return pl.BlockSpec(tuple(shape), lambda *_: (0,) * nd)


# ------------------------------ Pallas kernel --------------------------------

def _gate_kernel(cols_ref, wconv_ref, bshift_ref, wlin_ref, blin_ref, out_ref,
                 *, B, HO, WO, C):
    """Fused im2col'd stride-2 3x3 conv (+folded-BN shift, ReLU) -> global avg pool
    -> 1x1 conv -> log-softmax + hard gate.  Single MXU matmul for the conv."""
    # One (M, 9C) x (9C, C) matmul replaces the former 9 per-tap dots.
    y = jnp.dot(cols_ref[...], wconv_ref[...],
                preferred_element_type=jnp.float32)                 # (M, C) f32
    y = jnp.maximum(y + bshift_ref[...], 0.0)                       # folded-BN shift + ReLU

    # Global average pool (AvgPool2d kernel == conv output spatial) -> (B, C).
    inv = 1.0 / float(HO * WO)
    pooled = jnp.sum(y.reshape(B, HO * WO, C), axis=1) * inv

    # 1x1 conv -> 2 logits; log-softmax over the 2 classes (dim=1).
    logits = (jnp.dot(pooled, wlin_ref[...], preferred_element_type=jnp.float32)
              + blin_ref[...])                                      # (B, 2)
    m = jnp.max(logits, axis=-1, keepdims=True)
    e = jnp.exp(logits - m)
    logp = (logits - m) - jnp.log(jnp.sum(e, axis=-1, keepdims=True))

    # softmax[:,1] > 0.5  <=>  logits[:,1] > logits[:,0]  (straight-through forward value).
    gate = (logits[:, 1:2] > logits[:, 0:1]).astype(jnp.float32)    # (B, 1)

    # Merged lane-dense output: col 0 = gate, cols 1:3 = logprob.
    out_ref[:, 0:1] = gate
    out_ref[:, 1:3] = logp


# ------------------------------ wrapper / glue --------------------------------

def feedforward_gate_ii(params, x_nchw):
    """FeedforwardGateII forward (eval mode). Returns (gate (B,1,1,1), logprob (B,2))."""
    B, C, H, W = x_nchw.shape
    HO, WO = (H + 1) // 2, (W + 1) // 2            # conv3x3 stride=2 pad=1 output spatial

    # Single prep fusion: NCHW -> NHWC, pad, 9 stride-2 tap slices concatenated along the
    # channel axis -> kernel-ready (M, 9C) im2col slab (tiny: ~72 KiB f32 at these shapes).
    x = jnp.transpose(x_nchw, (0, 2, 3, 1)).astype(jnp.float32)
    xp = jnp.pad(x, ((0, 0), (1, 1), (1, 1), (0, 0)))
    taps = [xp[:, dy:dy + 2 * HO - 1:2, dx:dx + 2 * WO - 1:2, :]
            for dy in range(3) for dx in range(3)]
    cols = jnp.concatenate(taps, axis=-1).reshape(B * HO * WO, 9 * C)

    out = pl.pallas_call(
        functools.partial(_gate_kernel, B=B, HO=HO, WO=WO, C=C),
        out_shape=jax.ShapeDtypeStruct((B, 3), jnp.float32),
        grid=(1,),
        in_specs=[_full_spec(cols.shape),
                  _full_spec(params['conv_w_mat'].shape),
                  _full_spec(params['bn_shift'].shape),
                  _full_spec(params['lin_w'].shape),
                  _full_spec(params['lin_b'].shape)],
        out_specs=_full_spec((B, 3)),
        compiler_params=pltpu.CompilerParams(dimension_semantics=("arbitrary",)),
    )(cols, params['conv_w_mat'], params['bn_shift'], params['lin_w'], params['lin_b'])

    gate = out[:, 0].reshape(B, 1, 1, 1)
    logprob = out[:, 1:3]
    return gate, logprob


# ------------------------------ parameters ------------------------------------

def init_raw_params(key, channel=16):
    """PyTorch-layout parameters (eval-mode BN buffers at their defaults)."""
    k1, k2, k3 = jax.random.split(key, 3)
    n = 3 * 3 * channel
    conv_w = jax.random.normal(k1, (channel, channel, 3, 3), jnp.float32) * math.sqrt(2.0 / n)
    bound = 1.0 / math.sqrt(channel)               # Conv2d(channel, 2, k=1) default init bound
    lin_w = jax.random.uniform(k2, (2, channel, 1, 1), jnp.float32, -bound, bound)
    lin_b = jax.random.uniform(k3, (2,), jnp.float32, -bound, bound)
    return {
        'conv_w': conv_w,
        'bn_gamma': jnp.ones((channel,), jnp.float32),
        'bn_beta': jnp.zeros((channel,), jnp.float32),
        'bn_mean': jnp.zeros((channel,), jnp.float32),
        'bn_var': jnp.ones((channel,), jnp.float32),
        'lin_w': lin_w,
        'lin_b': lin_b,
    }


def prepare_params(raw, eps=1e-5):
    """Fold eval-mode BN scale into the conv weights and flatten to im2col layout (9*Cin, Cout)."""
    cout, cin, _, _ = raw['conv_w'].shape
    scale = raw['bn_gamma'] / jnp.sqrt(raw['bn_var'] + eps)          # per output channel
    shift = raw['bn_beta'] - raw['bn_mean'] * scale
    # (Cout, Cin, 3, 3) -> (dy, dx, Cin, Cout) -> (9*Cin, Cout); BN scale folded into Cout.
    w_mat = (jnp.transpose(raw['conv_w'], (2, 3, 1, 0)) * scale).reshape(9 * cin, cout)
    lin_w = jnp.transpose(raw['lin_w'].reshape(2, cin), (1, 0))      # (Cin, 2)
    return {
        'conv_w_mat': w_mat.astype(jnp.float32),
        'bn_shift': shift.reshape(1, cout).astype(jnp.float32),
        'lin_w': lin_w.astype(jnp.float32),
        'lin_b': raw['lin_b'].reshape(1, 2).astype(jnp.float32),
    }


# ------------------------------ pure-JAX reference -----------------------------

def reference_forward(raw, x_nchw, eps=1e-5):
    """Pure-JAX (XLA) reference of the PyTorch module, eval mode."""
    scale = raw['bn_gamma'] / jnp.sqrt(raw['bn_var'] + eps)
    shift = raw['bn_beta'] - raw['bn_mean'] * scale
    y = jax.lax.conv_general_dilated(
        x_nchw.astype(jnp.float32), raw['conv_w'], window_strides=(2, 2),
        padding=((1, 1), (1, 1)), dimension_numbers=('NCHW', 'OIHW', 'NCHW'))
    y = jnp.maximum(y * scale[None, :, None, None] + shift[None, :, None, None], 0.0)
    pooled = jnp.mean(y, axis=(2, 3))                                # (B, C)
    logits = pooled @ raw['lin_w'].reshape(2, -1).T + raw['lin_b']   # (B, 2)
    p1 = jax.nn.softmax(logits, axis=1)[:, 1]
    gate = (p1 > 0.5).astype(jnp.float32).reshape(-1, 1, 1, 1)
    return gate, jax.nn.log_softmax(logits, axis=1)


# ---------------------------------- main ---------------------------------------

if __name__ == "__main__":
    key = jax.random.PRNGKey(0)
    pkey, xkey = jax.random.split(key)

    # FeedforwardGateII(pool_size=16, channel=16): input (B, channel, pool_size, pool_size)
    batch, channel, pool_size = 2, 16, 16
    raw = init_raw_params(pkey, channel)
    params = prepare_params(raw)
    x = jax.random.normal(xkey, (batch, channel, pool_size, pool_size), jnp.float32)

    fwd = jax.jit(feedforward_gate_ii)
    gate, logprob = fwd(params, x)
    jax.block_until_ready((gate, logprob))

    assert gate.shape == (batch, 1, 1, 1)
    assert logprob.shape == (batch, 2)
    assert bool(jnp.all((gate == 0.0) | (gate == 1.0)))              # hard mask

    gate_ref, logp_ref = reference_forward(raw, x)
    assert bool(jnp.all(gate == gate_ref)), "gate mismatch vs pure-JAX reference"
    assert bool(jnp.max(jnp.abs(logprob - logp_ref)) < 1e-4), "logprob mismatch vs reference"
    assert bool(jnp.all(jnp.abs(jnp.sum(jnp.exp(logprob), axis=1) - 1.0) < 1e-3))
    print("KERNEL_OK")
</pallas_src>

<mosaic_0001>
module attributes {stable_mosaic.version = 11 : i64} {
  func.func @_gate_kernel(%arg0: i32, %arg1: memref<128x144xf32, #tpu.memory_space<vmem>>, %arg2: memref<144x16xf32, #tpu.memory_space<vmem>>, %arg3: memref<1x16xf32, #tpu.memory_space<vmem>>, %arg4: memref<16x2xf32, #tpu.memory_space<vmem>>, %arg5: memref<1x2xf32, #tpu.memory_space<vmem>>, %arg6: memref<2x3xf32, #tpu.memory_space<vmem>>) attributes {dimension_semantics = [#tpu.dimension_semantics<arbitrary>], iteration_bounds = array<i64: 1>, scalar_prefetch = 0 : i64, scratch_operands = 0 : i64, tpu.core_type = #tpu.core_type<tc>, window_params = [{pipeline_mode = #tpu.pipeline_mode<synchronous>, transform_indices = @transform_0, window_bounds = array<i64: 128, 144>}, {pipeline_mode = #tpu.pipeline_mode<synchronous>, transform_indices = @transform_1, window_bounds = array<i64: 144, 16>}, {pipeline_mode = #tpu.pipeline_mode<synchronous>, transform_indices = @transform_2, window_bounds = array<i64: 1, 16>}, {pipeline_mode = #tpu.pipeline_mode<synchronous>, transform_indices = @transform_3, window_bounds = array<i64: 16, 2>}, {pipeline_mode = #tpu.pipeline_mode<synchronous>, transform_indices = @transform_4, window_bounds = array<i64: 1, 2>}, {pipeline_mode = #tpu.pipeline_mode<synchronous>, transform_indices = @transform_5, window_bounds = array<i64: 2, 3>}]} {
    %c0 = arith.constant 0 : index
    %c0_0 = arith.constant 0 : index
    %0 = vector.load %arg1[%c0, %c0_0] : memref<128x144xf32, #tpu.memory_space<vmem>>, vector<128x144xf32>
    %c0_1 = arith.constant 0 : index
    %c0_2 = arith.constant 0 : index
    %1 = vector.load %arg2[%c0_1, %c0_2] : memref<144x16xf32, #tpu.memory_space<vmem>>, vector<144x16xf32>
    %cst = arith.constant dense<0.000000e+00> : vector<128x16xf32>
    %2 = tpu.matmul %0, %1, %cst {dimension_numbers = #tpu.dot_dimension_numbers<[1], [0], [0], [1], [0, 0, 1, 1], [], []>} : vector<128x144xf32>, vector<144x16xf32>, vector<128x16xf32> -> vector<128x16xf32>
    %c0_3 = arith.constant 0 : index
    %c0_4 = arith.constant 0 : index
    %3 = vector.load %arg3[%c0_3, %c0_4] : memref<1x16xf32, #tpu.memory_space<vmem>>, vector<1x16xf32>
    %4 = vector.broadcast %3 : vector<1x16xf32> to vector<128x16xf32>
    %5 = arith.addf %2, %4 : vector<128x16xf32>
    %cst_5 = arith.constant 0.000000e+00 : f32
    %6 = vector.broadcast %cst_5 : f32 to vector<128x16xf32>
    %7 = arith.maximumf %5, %6 : vector<128x16xf32>
    %8 = vector.shape_cast %7 : vector<128x16xf32> to vector<2x64x16xf32>
    %cst_6 = arith.constant dense<0.000000e+00> : vector<2x16xf32>
    %9 = vector.multi_reduction <add>, %8, %cst_6 [1] : vector<2x64x16xf32> to vector<2x16xf32>
    %cst_7 = arith.constant 1.562500e-02 : f32
    %10 = vector.broadcast %cst_7 : f32 to vector<2x16xf32>
    %11 = arith.mulf %9, %10 : vector<2x16xf32>
    %c0_8 = arith.constant 0 : index
    %c0_9 = arith.constant 0 : index
    %12 = vector.load %arg4[%c0_8, %c0_9] : memref<16x2xf32, #tpu.memory_space<vmem>>, vector<16x2xf32>
    %cst_10 = arith.constant dense<0.000000e+00> : vector<2x2xf32>
    %13 = tpu.matmul %11, %12, %cst_10 {dimension_numbers = #tpu.dot_dimension_numbers<[1], [0], [0], [1], [0, 0, 1, 1], [], []>} : vector<2x16xf32>, vector<16x2xf32>, vector<2x2xf32> -> vector<2x2xf32>
    %c0_11 = arith.constant 0 : index
    %c0_12 = arith.constant 0 : index
    %14 = vector.load %arg5[%c0_11, %c0_12] : memref<1x2xf32, #tpu.memory_space<vmem>>, vector<1x2xf32>
    %15 = vector.broadcast %14 : vector<1x2xf32> to vector<2x2xf32>
    %16 = arith.addf %13, %15 : vector<2x2xf32>
    %cst_13 = arith.constant dense<0xFF800000> : vector<2xf32>
    %17 = vector.multi_reduction <maximumf>, %16, %cst_13 [1] : vector<2x2xf32> to vector<2xf32>
    %18 = vector.shape_cast %17 : vector<2xf32> to vector<2x1xf32>
    %19 = vector.broadcast %18 : vector<2x1xf32> to vector<2x2xf32>
    %20 = arith.subf %16, %19 : vector<2x2xf32>
    %21 = math.exp %20 : vector<2x2xf32>
    %22 = vector.broadcast %18 : vector<2x1xf32> to vector<2x2xf32>
    %23 = arith.subf %16, %22 : vector<2x2xf32>
    %cst_14 = arith.constant dense<0.000000e+00> : vector<2xf32>
    %24 = vector.multi_reduction <add>, %21, %cst_14 [1] : vector<2x2xf32> to vector<2xf32>
    %25 = vector.shape_cast %24 : vector<2xf32> to vector<2x1xf32>
    %26 = math.log %25 : vector<2x1xf32>
    %27 = vector.broadcast %26 : vector<2x1xf32> to vector<2x2xf32>
    %28 = arith.subf %23, %27 : vector<2x2xf32>
    %29 = vector.extract_strided_slice %16 {offsets = [0, 1], sizes = [2, 1], strides = [1, 1]} : vector<2x2xf32> to vector<2x1xf32>
    %30 = vector.extract_strided_slice %16 {offsets = [0, 0], sizes = [2, 1], strides = [1, 1]} : vector<2x2xf32> to vector<2x1xf32>
    %31 = arith.cmpf ogt, %29, %30 : vector<2x1xf32>
    %32 = arith.extui %31 : vector<2x1xi1> to vector<2x1xi32>
    %33 = arith.sitofp %32 : vector<2x1xi32> to vector<2x1xf32>
    %c0_15 = arith.constant 0 : index
    %c0_16 = arith.constant 0 : index
    %34 = vector.load %arg6[%c0_15, %c0_16] : memref<2x3xf32, #tpu.memory_space<vmem>>, vector<2x1xf32>
    tpu.vector_store %arg6[%c0_15, %c0_16], %33 {strides = array<i32>} : memref<2x3xf32, #tpu.memory_space<vmem>>, vector<2x1xf32>,
    %c0_17 = arith.constant 0 : index
    %c1 = arith.constant 1 : index
    %35 = vector.load %arg6[%c0_17, %c1] : memref<2x3xf32, #tpu.memory_space<vmem>>, vector<2x2xf32>
    tpu.vector_store %arg6[%c0_17, %c1], %28 {strides = array<i32>} : memref<2x3xf32, #tpu.memory_space<vmem>>, vector<2x2xf32>,
    return
  }
  func.func @transform_0(%arg0: i32) -> (i32, i32) {
    %c0_i32 = arith.constant 0 : i32
    %c0_i32_0 = arith.constant 0 : i32
    %c0_i32_1 = arith.constant 0 : i32
    return %c0_i32, %c0_i32_0 : i32, i32
  }
  func.func @transform_1(%arg0: i32) -> (i32, i32) {
    %c0_i32 = arith.constant 0 : i32
    %c0_i32_0 = arith.constant 0 : i32
    %c0_i32_1 = arith.constant 0 : i32
    return %c0_i32, %c0_i32_0 : i32, i32
  }
  func.func @transform_2(%arg0: i32) -> (i32, i32) {
    %c0_i32 = arith.constant 0 : i32
    %c0_i32_0 = arith.constant 0 : i32
    %c0_i32_1 = arith.constant 0 : i32
    return %c0_i32, %c0_i32_0 : i32, i32
  }
  func.func @transform_3(%arg0: i32) -> (i32, i32) {
    %c0_i32 = arith.constant 0 : i32
    %c0_i32_0 = arith.constant 0 : i32
    %c0_i32_1 = arith.constant 0 : i32
    return %c0_i32, %c0_i32_0 : i32, i32
  }
  func.func @transform_4(%arg0: i32) -> (i32, i32) {
    %c0_i32 = arith.constant 0 : i32
    %c0_i32_0 = arith.constant 0 : i32
    %c0_i32_1 = arith.constant 0 : i32
    return %c0_i32, %c0_i32_0 : i32, i32
  }
  func.func @transform_5(%arg0: i32) -> (i32, i32) {
    %c0_i32 = arith.constant 0 : i32
    %c0_i32_0 = arith.constant 0 : i32
    %c0_i32_1 = arith.constant 0 : i32
    return %c0_i32, %c0_i32_0 : i32, i32
  }
}

</mosaic_0001>

<llo_original>
// kernel: feedforward_gate_ii.1
$region0: #{feedforward_gate_ii.1}
  #allocation0 [shape = 'u32[]', space=smem, size = 0x4, offset = 0x4, fixed_abs, tag = 'smem constant byte address 0x4 - core index']
  #allocation1 [shape = 'u32[144,128]{1,0:T(1,128)}', space=vmem, size = 0x12000, scoped, tag = 'internal scratch']
  %s0 = inlined_call_operand.vmem [shape: f32[128,144], index: 0, kind: input, shape index: {}]
  %s1 = inlined_call_operand.vmem [shape: f32[144,16], index: 1, kind: input, shape index: {}]
  %s2 = inlined_call_operand.vmem [shape: f32[1,16], index: 2, kind: input, shape index: {}]
  %s3 = inlined_call_operand.vmem [shape: f32[16,2], index: 3, kind: input, shape index: {}]
  %s4 = inlined_call_operand.vmem [shape: f32[1,2], index: 4, kind: input, shape index: {}]
  %s5 = inlined_call_operand.vmem [shape: f32[2,3], index: 5, kind: output, shape index: {}]
  %s6 = sld [smem:[#allocation0]]
  $region30: #{feedforward_gate_ii.1} parent=0
    _
  %s8 = ssub.s32 1, %s6
  %s9 = scalar_select 0, %s8, %s6
  // Predicated region
  $region2: #{feedforward_gate_ii.1} parent=0 // pred_check
    _
  $region3: #{feedforward_gate_ii.1} parent=0 // pred_check_branch
    %11 = sbr.rel (0) target = $region5
  $region4: #{feedforward_gate_ii.1} parent=0 // pred_region
    _
  $region5: #{feedforward_gate_ii.1} parent=0 // pred_fallthru
    _
  // Predicated region
  $region6: #{feedforward_gate_ii.1} parent=0 // pred_check
    _
  $region7: #{feedforward_gate_ii.1} parent=0 // pred_check_branch
    %13 = sbr.rel (0) target = $region9
  $region8: #{feedforward_gate_ii.1} parent=0 // pred_region
    _
  $region9: #{feedforward_gate_ii.1} parent=0 // pred_fallthru
    _
  // Predicated region
  $region10: #{feedforward_gate_ii.1} parent=0 // pred_check
    _
  $region11: #{feedforward_gate_ii.1} parent=0 // pred_check_branch
    %15 = sbr.rel (0) target = $region13
  $region12: #{feedforward_gate_ii.1} parent=0 // pred_region
    _
  $region13: #{feedforward_gate_ii.1} parent=0 // pred_fallthru
    _
  // Predicated region
  $region14: #{feedforward_gate_ii.1} parent=0 // pred_check
    _
  $region15: #{feedforward_gate_ii.1} parent=0 // pred_check_branch
    %17 = sbr.rel (0) target = $region17
  $region16: #{feedforward_gate_ii.1} parent=0 // pred_region
    _
  $region17: #{feedforward_gate_ii.1} parent=0 // pred_fallthru
    _
  // Predicated region
  $region18: #{feedforward_gate_ii.1} parent=0 // pred_check
    _
  $region19: #{feedforward_gate_ii.1} parent=0 // pred_check_branch
    %19 = sbr.rel (0) target = $region21
  $region20: #{feedforward_gate_ii.1} parent=0 // pred_region
    _
  $region21: #{feedforward_gate_ii.1} parent=0 // pred_fallthru
    _
  %v20 = vld [vmem:[%s0] sm:$0xff]
  %v21 = vld [vmem:[%s0 + $0x8] sm:$0xff]
  %v22 = vld [vmem:[%s0 + $0x10] sm:$0xff]
  %v23 = vld [vmem:[%s0 + $0x18] sm:$0xff]
  %v24 = vld [vmem:[%s0 + $0x20] sm:$0xff]
  %v25 = vld [vmem:[%s0 + $0x28] sm:$0xff]
  %v26 = vld [vmem:[%s0 + $0x30] sm:$0xff]
  %v27 = vld [vmem:[%s0 + $0x38] sm:$0xff]
  %v28 = vld [vmem:[%s0 + $0x40] sm:$0xff]
  %v29 = vld [vmem:[%s0 + $0x48] sm:$0xff]
  %v30 = vld [vmem:[%s0 + $0x50] sm:$0xff]
  %v31 = vld [vmem:[%s0 + $0x58] sm:$0xff]
  %v32 = vld [vmem:[%s0 + $0x60] sm:$0xff]
  %v33 = vld [vmem:[%s0 + $0x68] sm:$0xff]
  %v34 = vld [vmem:[%s0 + $0x70] sm:$0xff]
  %v35 = vld [vmem:[%s0 + $0x78] sm:$0xff]
  %v36 = vld [vmem:[%s0 + $0x80] sm:$0xff]
  %v37 = vld [vmem:[%s0 + $0x88] sm:$0xff]
  %v38 = vld [vmem:[%s0 + $0x90] sm:$0xff]
  %v39 = vld [vmem:[%s0 + $0x98] sm:$0xff]
  %v40 = vld [vmem:[%s0 + $0xa0] sm:$0xff]
  %v41 = vld [vmem:[%s0 + $0xa8] sm:$0xff]
  %v42 = vld [vmem:[%s0 + $0xb0] sm:$0xff]
  %v43 = vld [vmem:[%s0 + $0xb8] sm:$0xff]
  %v44 = vld [vmem:[%s0 + $0xc0] sm:$0xff]
  %v45 = vld [vmem:[%s0 + $0xc8] sm:$0xff]
  %v46 = vld [vmem:[%s0 + $0xd0] sm:$0xff]
  %v47 = vld [vmem:[%s0 + $0xd8] sm:$0xff]
  %v48 = vld [vmem:[%s0 + $0xe0] sm:$0xff]
  %v49 = vld [vmem:[%s0 + $0xe8] sm:$0xff]
  %v50 = vld [vmem:[%s0 + $0xf0] sm:$0xff]
  %v51 = vld [vmem:[%s0 + $0xf8] sm:$0xff]
  %v52 = vld [vmem:[%s1] sm:$0xff]
  %v53 = vld [vmem:[%s1 + $0x8] sm:$0xff]
  %v54 = vld [vmem:[%s1 + $0x10] sm:$0xff]
  %v55 = vld [vmem:[%s1 + $0x18] sm:$0xff]
  %v56 = vld [vmem:[%s1 + $0x20] sm:$0xff]
  %v57 = vld [vmem:[%s1 + $0x28] sm:$0xff]
  %v58 = vld [vmem:[%s1 + $0x30] sm:$0xff]
  %v59 = vld [vmem:[%s1 + $0x38] sm:$0xff]
  %v60 = vld [vmem:[%s1 + $0x40] sm:$0xff]
  %v61 = vld [vmem:[%s1 + $0x48] sm:$0xff]
  %v62 = vld [vmem:[%s1 + $0x50] sm:$0xff]
  %v63 = vld [vmem:[%s1 + $0x58] sm:$0xff]
  %v64 = vld [vmem:[%s1 + $0x60] sm:$0xff]
  %v65 = vld [vmem:[%s1 + $0x68] sm:$0xff]
  %v66 = vld [vmem:[%s1 + $0x70] sm:$0xff]
  %v67 = vld [vmem:[%s1 + $0x78] sm:$0xff]
  %v68 = vld [vmem:[%s1 + $0x80] sm:$0xff]
  %v69 = vld [vmem:[%s1 + $0x88] sm:$0xff]
  %v70 = vld [vmem:[%s2] sm:$0x1]
  %v72 = vlaneseq
  %v73 = vshrl.u32 %v72, 7
  %v74 = vsub.s32 0, %v73
  %v75 = vrot.slane %v70, %v74
  %vm77 = vcmask 130048
  %v79 = vsel %vm77, %v21, 0
  %v82 = vsel %vm77, %v23, 0
  %v85 = vsel %vm77, %v25, 0
  %v88 = vsel %vm77, %v27, 0
  %v91 = vsel %vm77, %v29, 0
  %v94 = vsel %vm77, %v31, 0
  %v97 = vsel %vm77, %v33, 0
  %v100 = vsel %vm77, %v35, 0
  %v103 = vsel %vm77, %v37, 0
  %v106 = vsel %vm77, %v39, 0
  %v109 = vsel %vm77, %v41, 0
  %v112 = vsel %vm77, %v43, 0
  %v115 = vsel %vm77, %v45, 0
  %v118 = vsel %vm77, %v47, 0
  %v121 = vsel %vm77, %v49, 0
  %v124 = vsel %vm77, %v51, 0
  %126 = vmatprep.subr.mxu0 0.0
  %127 = vmatpush1.msra.mxu0 %v52
  %128 = vmatprep.subr.mxu0 0.0
  %129 = vmatpush1.msra.mxu0 %v53
  %130 = vmatprep.subr.mxu0 0.0
  %131 = vmatpush1.msra.mxu0 %v54
  %132 = vmatprep.subr.mxu0 0.0
  %133 = vmatpush1.msra.mxu0 %v55
  %134 = vmatprep.subr.mxu0 0.0
  %135 = vmatpush1.msra.mxu0 %v56
  %136 = vmatprep.subr.mxu0 0.0
  %137 = vmatpush1.msra.mxu0 %v57
  %138 = vmatprep.subr.mxu0 0.0
  %139 = vmatpush1.msra.mxu0 %v58
  %140 = vmatprep.subr.mxu0 0.0
  %141 = vmatpush1.msra.mxu0 %v59
  %142 = vmatprep.subr.mxu0 0.0
  %143 = vmatpush1.msra.mxu0 %v60
  %144 = vmatprep.subr.mxu0 0.0
  %145 = vmatpush1.msra.mxu0 %v61
  %146 = vmatprep.subr.mxu0 0.0
  %147 = vmatpush1.msra.mxu0 %v62
  %148 = vmatprep.subr.mxu0 0.0
  %149 = vmatpush1.msra.mxu0 %v63
  %150 = vmatprep.subr.mxu0 0.0
  %151 = vmatpush1.msra.mxu0 %v64
  %152 = vmatprep.subr.mxu0 0.0
  %153 = vmatpush1.msra.mxu0 %v65
  %154 = vmatprep.subr.mxu0 0.0
  %155 = vmatpush1.msra.mxu0 %v66
  %156 = vmatprep.subr.mxu0 0.0
  %157 = vmatpush1.msra.mxu0 %v67
  %158 = vmatprep.subr.mxu0 0.0
  %159 = vmatpush1.msra.mxu0 %v68
  %160 = vmatprep.subr.mxu0 0.0
  %161 = vmatpush1.msra.mxu0 %v69
  %162 = vmatprep.subr.mxu0 0.0
  %163 = vmatpush1.msra.mxu0 0.0
  %164 = vmatprep.subr.mxu0 0.0
  %165 = vmatpush1.msra.mxu0 0.0
  %166 = vmatprep.subr.mxu0 0.0
  %167 = vmatpush1.msra.mxu0 0.0
  %168 = vmatprep.subr.mxu0 0.0
  %169 = vmatpush1.msra.mxu0 0.0
  %170 = vmatprep.subr.mxu0 0.0
  %171 = vmatpush1.msra.mxu0 0.0
  %172 = vmatprep.subr.mxu0 0.0
  %173 = vmatpush1.msra.mxu0 0.0
  %174 = vmatprep.subr.mxu0 0.0
  %175 = vmatpush1.msra.mxu0 0.0
  %176 = vmatprep.subr.mxu0 0.0
  %177 = vmatpush1.msra.mxu0 0.0
  %178 = vmatprep.subr.mxu0 0.0
  %179 = vmatpush1.msra.mxu0 0.0
  %180 = vmatprep.subr.mxu0 0.0
  %181 = vmatpush1.msra.mxu0 0.0
  %182 = vmatprep.subr.mxu0 0.0
  %183 = vmatpush1.msra.mxu0 0.0
  %184 = vmatprep.subr.mxu0 0.0
  %185 = vmatpush1.msra.mxu0 0.0
  %186 = vmatprep.subr.mxu0 0.0
  %187 = vmatpush1.msra.mxu0 0.0
  %188 = vmatprep.subr.mxu0 0.0
  %189 = vmatpush1.msra.mxu0 0.0
  %190 = vmatprep.mubr.f32.mxu0 %v79
  %191 = vmatmul.mubr.f32.gmra.mrb[0].mxu0 %v20
  %v192 = vpop.f32.mrb[0].mxu0
  %v193 = vadd.f32 %v75, %v192
  %v194 = vpop.f32.mrb[0].mxu0
  %195 = vmatprep.mubr.f32.mxu0 %v82
  %196 = vmatmul.mubr.f32.gmra.mrb[0].mxu0 %v22
  %v197 = vpop.f32.mrb[0].mxu0
  %v198 = vadd.f32 %v75, %v197
  %v199 = vpop.f32.mrb[0].mxu0
  %200 = vmatprep.mubr.f32.mxu0 %v85
  %201 = vmatmul.mubr.f32.gmra.mrb[0].mxu0 %v24
  %v202 = vpop.f32.mrb[0].mxu0
  %v203 = vadd.f32 %v75, %v202
  %v204 = vpop.f32.mrb[0].mxu0
  %205 = vmatprep.mubr.f32.mxu0 %v88
  %206 = vmatmul.mubr.f32.gmra.mrb[0].mxu0 %v26
  %v207 = vpop.f32.mrb[0].mxu0
  %v208 = vadd.f32 %v75, %v207
  %v209 = vpop.f32.mrb[0].mxu0
  %210 = vmatprep.mubr.f32.mxu0 %v91
  %211 = vmatmul.mubr.f32.gmra.mrb[0].mxu0 %v28
  %v212 = vpop.f32.mrb[0].mxu0
  %v213 = vadd.f32 %v75, %v212
  %v214 = vpop.f32.mrb[0].mxu0
  %215 = vmatprep.mubr.f32.mxu0 %v94
  %216 = vmatmul.mubr.f32.gmra.mrb[0].mxu0 %v30
  %v217 = vpop.f32.mrb[0].mxu0
  %v218 = vadd.f32 %v75, %v217
  %v219 = vpop.f32.mrb[0].mxu0
  %220 = vmatprep.mubr.f32.mxu0 %v97
  %221 = vmatmul.mubr.f32.gmra.mrb[0].mxu0 %v32
  %v222 = vpop.f32.mrb[0].mxu0
  %v223 = vadd.f32 %v75, %v222
  %v224 = vpop.f32.mrb[0].mxu0
  %225 = vmatprep.mubr.f32.mxu0 %v100
  %226 = vmatmul.mubr.f32.gmra.mrb[0].mxu0 %v34
  %v227 = vpop.f32.mrb[0].mxu0
  %v228 = vadd.f32 %v75, %v227
  %v229 = vpop.f32.mrb[0].mxu0
  %230 = vmatprep.mubr.f32.mxu0 %v103
  %231 = vmatmul.mubr.f32.gmra.mrb[0].mxu0 %v36
  %v232 = vpop.f32.mrb[0].mxu0
  %v233 = vadd.f32 %v75, %v232
  %v234 = vpop.f32.mrb[0].mxu0
  %235 = vmatprep.mubr.f32.mxu0 %v106
  %236 = vmatmul.mubr.f32.gmra.mrb[0].mxu0 %v38
  %v237 = vpop.f32.mrb[0].mxu0
  %v238 = vadd.f32 %v75, %v237
  %v239 = vpop.f32.mrb[0].mxu0
  %240 = vmatprep.mubr.f32.mxu0 %v109
  %241 = vmatmul.mubr.f32.gmra.mrb[0].mxu0 %v40
  %v242 = vpop.f32.mrb[0].mxu0
  %v243 = vadd.f32 %v75, %v242
  %v244 = vpop.f32.mrb[0].mxu0
  %245 = vmatprep.mubr.f32.mxu0 %v112
  %246 = vmatmul.mubr.f32.gmra.mrb[0].mxu0 %v42
  %v247 = vpop.f32.mrb[0].mxu0
  %v248 = vadd.f32 %v75, %v247
  %v249 = vpop.f32.mrb[0].mxu0
  %250 = vmatprep.mubr.f32.mxu0 %v115
  %251 = vmatmul.mubr.f32.gmra.mrb[0].mxu0 %v44
  %v252 = vpop.f32.mrb[0].mxu0
  %v253 = vadd.f32 %v75, %v252
  %v254 = vpop.f32.mrb[0].mxu0
  %255 = vmatprep.mubr.f32.mxu0 %v118
  %256 = vmatmul.mubr.f32.gmra.mrb[0].mxu0 %v46
  %v257 = vpop.f32.mrb[0].mxu0
  %v258 = vadd.f32 %v75, %v257
  %v259 = vpop.f32.mrb[0].mxu0
  %260 = vmatprep.mubr.f32.mxu0 %v121
  %261 = vmatmul.mubr.f32.gmra.mrb[0].mxu0 %v48
  %v262 = vpop.f32.mrb[0].mxu0
  %v263 = vadd.f32 %v75, %v262
  %v264 = vpop.f32.mrb[0].mxu0
  %265 = vmatprep.mubr.f32.mxu0 %v124
  %266 = vmatmul.mubr.f32.gmra.mrb[0].mxu0 %v50
  %v267 = vpop.f32.mrb[0].mxu0
  %v268 = vadd.f32 %v75, %v267
  %v269 = vpop.f32.mrb[0].mxu0
  %270 = vdwg.mxu0
  %v271 = vmax.f32 %v193, 0.0
  %v272 = vmax.f32 %v198, 0.0
  %v273 = vmax.f32 %v203, 0.0
  %v274 = vmax.f32 %v208, 0.0
  %v275 = vmax.f32 %v213, 0.0
  %v276 = vmax.f32 %v218, 0.0
  %v277 = vmax.f32 %v223, 0.0
  %v278 = vmax.f32 %v228, 0.0
  %v279 = vmax.f32 %v233, 0.0
  %v280 = vmax.f32 %v238, 0.0
  %v281 = vmax.f32 %v243, 0.0
  %v282 = vmax.f32 %v248, 0.0
  %v283 = vmax.f32 %v253, 0.0
  %v284 = vmax.f32 %v258, 0.0
  %v285 = vmax.f32 %v263, 0.0
  %v286 = vmax.f32 %v268, 0.0
  %v287 = vsel %vm77, %v271, 0.0
  %v288 = vsel %vm77, %v272, 0.0
  %v289 = vadd.f32 %v287, %v288
  %v290 = vsel %vm77, %v273, 0.0
  %v291 = vadd.f32 %v289, %v290
  %v292 = vsel %vm77, %v274, 0.0
  %v293 = vadd.f32 %v291, %v292
  %v294 = vsel %vm77, %v275, 0.0
  %v295 = vadd.f32 %v293, %v294
  %v296 = vsel %vm77, %v276, 0.0
  %v297 = vadd.f32 %v295, %v296
  %v298 = vsel %vm77, %v277, 0.0
  %v299 = vadd.f32 %v297, %v298
  %v300 = vsel %vm77, %v278, 0.0
  %v301 = vadd.f32 %v299, %v300
  %v302 = vrot.slane %v301, 4
  %v303 = vadd.f32 %v301, %v302
  %v304 = vrot.slane %v303, 2
  %v305 = vadd.f32 %v303, %v304
  %v306 = vrot.slane %v305, 1
  %v307 = vadd.f32 %v305, %v306
  %v308 = vsel %vm77, %v279, 0.0
  %v309 = vsel %vm77, %v280, 0.0
  %v310 = vadd.f32 %v308, %v309
  %v311 = vsel %vm77, %v281, 0.0
  %v312 = vadd.f32 %v310, %v311
  %v313 = vsel %vm77, %v282, 0.0
  %v314 = vadd.f32 %v312, %v313
  %v315 = vsel %vm77, %v283, 0.0
  %v316 = vadd.f32 %v314, %v315
  %v317 = vsel %vm77, %v284, 0.0
  %v318 = vadd.f32 %v316, %v317
  %v319 = vsel %vm77, %v285, 0.0
  %v320 = vadd.f32 %v318, %v319
  %v321 = vsel %vm77, %v286, 0.0
  %v322 = vadd.f32 %v320, %v321
  %v323 = vrot.slane %v322, 4
  %v324 = vadd.f32 %v322, %v323
  %v325 = vrot.slane %v324, 2
  %v326 = vadd.f32 %v324, %v325
  %v327 = vrot.slane %v326, 1
  %v328 = vadd.f32 %v326, %v327
  %v329 = vmul.f32 %v307, 0.015625
  %v330 = vmul.f32 %v328, 0.015625
  %v331 = vld [vmem:[%s3] sm:$0xff]
  %v332 = vld [vmem:[%s3 + $0x8] sm:$0xff]
  %v333 = vld [vmem:[%s4] sm:$0x1]
  %v335 = vlaneseq
  %v336 = vshrl.u32 %v335, 7
  %v337 = vsub.s32 0, %v336
  %v338 = vrot.slane %v333, %v337
  %vm342 = vcmask 1041409
  %v343 = vsel %vm342, %v330, %v329
  %v344 = vsel %vm77, %v343, 0
  %346 = vmatprep.subr.mxu0 0.0
  %347 = vmatpush1.msra.mxu0 %v331
  %348 = vmatprep.subr.mxu0 0.0
  %349 = vmatpush1.msra.mxu0 %v332
  %350 = vmatprep.subr.mxu0 0.0
  %351 = vmatpush1.msra.mxu0 0.0
  %352 = vmatprep.subr.mxu0 0.0
  %353 = vmatpush1.msra.mxu0 0.0
  %354 = vmatprep.subr.mxu0 0.0
  %355 = vmatpush1.msra.mxu0 0.0
  %356 = vmatprep.subr.mxu0 0.0
  %357 = vmatpush1.msra.mxu0 0.0
  %358 = vmatprep.subr.mxu0 0.0
  %359 = vmatpush1.msra.mxu0 0.0
  %360 = vmatprep.subr.mxu0 0.0
  %361 = vmatpush1.msra.mxu0 0.0
  %362 = vmatprep.subr.mxu0 0.0
  %363 = vmatpush1.msra.mxu0 0.0
  %364 = vmatprep.subr.mxu0 0.0
  %365 = vmatpush1.msra.mxu0 0.0
  %366 = vmatprep.subr.mxu0 0.0
  %367 = vmatpush1.msra.mxu0 0.0
  %368 = vmatprep.subr.mxu0 0.0
  %369 = vmatpush1.msra.mxu0 0.0
  %370 = vmatprep.subr.mxu0 0.0
  %371 = vmatpush1.msra.mxu0 0.0
  %372 = vmatprep.subr.mxu0 0.0
  %373 = vmatpush1.msra.mxu0 0.0
  %374 = vmatprep.subr.mxu0 0.0
  %375 = vmatpush1.msra.mxu0 0.0
  %376 = vmatprep.subr.mxu0 0.0
  %377 = vmatpush1.msra.mxu0 0.0
  %378 = vmatprep.subr.mxu0 0.0
  %379 = vmatpush1.msra.mxu0 0.0
  %380 = vmatprep.subr.mxu0 0.0
  %381 = vmatpush1.msra.mxu0 0.0
  %382 = vmatprep.subr.mxu0 0.0
  %383 = vmatpush1.msra.mxu0 0.0
  %384 = vmatprep.subr.mxu0 0.0
  %385 = vmatpush1.msra.mxu0 0.0
  %386 = vmatprep.subr.mxu0 0.0
  %387 = vmatpush1.msra.mxu0 0.0
  %388 = vmatprep.subr.mxu0 0.0
  %389 = vmatpush1.msra.mxu0 0.0
  %390 = vmatprep.subr.mxu0 0.0
  %391 = vmatpush1.msra.mxu0 0.0
  %392 = vmatprep.subr.mxu0 0.0
  %393 = vmatpush1.msra.mxu0 0.0
  %394 = vmatprep.subr.mxu0 0.0
  %395 = vmatpush1.msra.mxu0 0.0
  %396 = vmatprep.subr.mxu0 0.0
  %397 = vmatpush1.msra.mxu0 0.0
  %398 = vmatprep.subr.mxu0 0.0
  %399 = vmatpush1.msra.mxu0 0.0
  %400 = vmatprep.subr.mxu0 0.0
  %401 = vmatpush1.msra.mxu0 0.0
  %402 = vmatprep.subr.mxu0 0.0
  %403 = vmatpush1.msra.mxu0 0.0
  %404 = vmatprep.subr.mxu0 0.0
  %405 = vmatpush1.msra.mxu0 0.0
  %406 = vmatprep.subr.mxu0 0.0
  %407 = vmatpush1.msra.mxu0 0.0
  %408 = vmatprep.subr.mxu0 0.0
  %409 = vmatpush1.msra.mxu0 0.0
  %410 = vmatprep.mubr.f32.mxu0 0.0
  %411 = vmatmul.mubr.f32.gmra.mrb[0].mxu0 %v344
  %v412 = vpop.f32.mrb[0].mxu0
  %v413 = vadd.f32 %v338, %v412
  %v414 = vpop.f32.mrb[0].mxu0
  %415 = vdwg.mxu0
  %vm416 = vcmask 9216
  %v417 = vsel %vm416, %v413, -inf
  %418 = vmax.xlane.f32.xlu0 %v417
  %v419 = vpop.xlane.xlu0 %418
  %v420 = vsub.f32 %v413, %v419
  %v421 = vmul.f32 %v420, 1.442695
  %v422 = vpow.pop %v421
  %v423 = vsel %vm416, %v422, 0.0
  %424 = vadd.xlane.f32.xlu0 %v423
  %v425 = vpop.xlane.xlu0 %424
  %v426 = vlog2.pop %v425
  %v427 = vmul.f32 %v426, 0.6931472
  %v428 = vsub.f32 %v420, %v427
  %430 = vrot.lane.b32.xlu0 %v413, 1
  %v431 = vpop.permute.xlu0 %430
  %vm433 = vcmp.gt.f32.partialorder %v413, %v431
  %v434 = vsel %vm433, 1, 0
  %v435 = vcvt.s32.f32 %v434
  %437 = vrot.lane.b32.xlu0 %v435, 127
  %v438 = vpop.permute.xlu0 %437
  %vm440 = vcmask 1024
  %441 = vst.msk [vmem:[%s5] sm:$0x3] %vm440, %v438
  %443 = vrot.lane.b32.xlu0 %v428, 1
  %v444 = vpop.permute.xlu0 %443
  %vm446 = vcmask 17416
  %447 = vst.msk [vmem:[%s5] sm:$0x3] %vm446, %v444
  // Predicated region
  $region22: #{feedforward_gate_ii.1} parent=0 // pred_check
    _
  $region23: #{feedforward_gate_ii.1} parent=0 // pred_check_branch
    %449 = sbr.rel (0) target = $region25
  $region24: #{feedforward_gate_ii.1} parent=0 // pred_region
    _
  $region25: #{feedforward_gate_ii.1} parent=0 // pred_fallthru
    _
  // Predicated region
  $region26: #{feedforward_gate_ii.1} parent=0 // pred_check
    _
  $region27: #{feedforward_gate_ii.1} parent=0 // pred_check_branch
    %451 = sbr.rel (0) target = $region29
  $region28: #{feedforward_gate_ii.1} parent=0 // pred_region
    _
  $region29: #{feedforward_gate_ii.1} parent=0 // pred_fallthru
    _

</llo_original>
